<compile_context>
chip_gen: v6e
topology: v6e:2x2x1
jax: 0.10.0
libtpu: 0.0.40
codegen_flags: <defaults>
</compile_context>

<pallas_src>
import jax
import jax.numpy as jnp
from jax.experimental import pallas as pl
from jax.experimental.pallas import tpu as pltpu

LANE = 128
SUBLANE = 8


def _round_up(n, m):
    return ((n + m - 1) // m) * m


def _pad_cols(a, target):
    pad = target - a.shape[1]
    return a if pad == 0 else jnp.pad(a, ((0, 0), (0, pad)))


def _pad_rows(a, target):
    pad = target - a.shape[0]
    return a if pad == 0 else jnp.pad(a, ((0, pad), (0, 0)))


def mlp_kernel(x_ref, w1_ref, b1_ref, w2_ref, b2_ref, w3_ref, b3_ref, o_ref):
    # fc1 + relu:  (tm, F) @ (F, H1P)
    h1 = jnp.dot(x_ref[...], w1_ref[...], preferred_element_type=jnp.float32) + b1_ref[...]
    h1 = jnp.maximum(h1, 0.0)
    # fc2 + relu:  (tm, H1P) @ (H1P, H2P)
    h2 = jnp.dot(h1, w2_ref[...], preferred_element_type=jnp.float32) + b2_ref[...]
    h2 = jnp.maximum(h2, 0.0)
    # fc3 (pre-sigmoid), narrow (tm, out) store; sigmoid applied in the wrapper.
    o_ref[...] = jnp.dot(h2, w3_ref[...], preferred_element_type=jnp.float32) + b3_ref[...]


def complex_nn_forward(x, params, *, tm_max=2048):
    """Pallas implementation of ComplexNN.forward.

    x: (B, input_size) float32
    params: dict with w1 (in,h1), b1 (1,h1), w2 (h1,h2), b2 (1,h2),
            w3 (h2,out), b3 (1,out)  -- weights stored as (in_features, out_features)
    returns: (B, out) float32
    """
    B, F = x.shape
    out_size = params["w3"].shape[1]

    # Lane-pad hidden dims only (tiny, one-time weight copies); input F and the
    # output width are left at their logical sizes.
    h1p = _round_up(params["w1"].shape[1], LANE)
    h2p = _round_up(params["w2"].shape[1], LANE)

    w1 = _pad_cols(params["w1"], h1p)
    b1 = _pad_cols(params["b1"], h1p)
    w2 = _pad_cols(_pad_rows(params["w2"], h1p), h2p)
    b2 = _pad_cols(params["b2"], h2p)
    w3 = _pad_rows(params["w3"], h2p)
    b3 = params["b3"]

    # Batch tiling: large tiles, no wrapper padding of x/output (ragged last block
    # is masked on write).  Keep >=2 grid steps when possible for v7x megacore.
    tm = min(tm_max, _round_up(pl.cdiv(B, 2), SUBLANE))
    tm = max(tm, SUBLANE)
    grid = (pl.cdiv(B, tm),)

    in_specs = [
        pl.BlockSpec((tm, F), lambda i: (i, 0)),       # x: tiled over batch (streamed)
        pl.BlockSpec(w1.shape, lambda i: (0, 0)),      # weights/biases: VMEM-resident
        pl.BlockSpec(b1.shape, lambda i: (0, 0)),
        pl.BlockSpec(w2.shape, lambda i: (0, 0)),
        pl.BlockSpec(b2.shape, lambda i: (0, 0)),
        pl.BlockSpec(w3.shape, lambda i: (0, 0)),
        pl.BlockSpec(b3.shape, lambda i: (0, 0)),
    ]

    z = pl.pallas_call(
        mlp_kernel,
        out_shape=jax.ShapeDtypeStruct((B, out_size), jnp.float32),
        grid=grid,
        in_specs=in_specs,
        out_specs=pl.BlockSpec((tm, out_size), lambda i: (i, 0)),
        compiler_params=pltpu.CompilerParams(
            dimension_semantics=("parallel",),
            vmem_limit_bytes=32 * 1024 * 1024),
    )(x, w1, b1, w2, b2, w3, b3)

    # Cheap sigmoid over (B, out) scalars outside the 128-lane-padded kernel domain.
    return jax.nn.sigmoid(z)


def init_params(key, input_size, hidden_size1, hidden_size2, output_size):
    """Deterministic init mimicking PyTorch nn.Linear default (uniform +/- 1/sqrt(fan_in))."""
    def linear_init(k, fan_in, fan_out):
        kw, kb = jax.random.split(k)
        bound = 1.0 / jnp.sqrt(fan_in)
        w = jax.random.uniform(kw, (fan_in, fan_out), jnp.float32, -bound, bound)
        b = jax.random.uniform(kb, (1, fan_out), jnp.float32, -bound, bound)
        return w, b

    k1, k2, k3 = jax.random.split(key, 3)
    w1, b1 = linear_init(k1, input_size, hidden_size1)
    w2, b2 = linear_init(k2, hidden_size1, hidden_size2)
    w3, b3 = linear_init(k3, hidden_size2, output_size)
    return {"w1": w1, "b1": b1, "w2": w2, "b2": b2, "w3": w3, "b3": b3}


def reference_forward(x, p):
    h1 = jnp.maximum(x @ p["w1"] + p["b1"], 0.0)
    h2 = jnp.maximum(h1 @ p["w2"] + p["b2"], 0.0)
    return jax.nn.sigmoid(h2 @ p["w3"] + p["b3"])


if __name__ == "__main__":
    input_size = 16      # inputs_resampled.shape[1] (synthetic choice)
    hidden_size1 = 8
    hidden_size2 = 4
    output_size = 1
    batch = 8

    key = jax.random.PRNGKey(0)
    kx, kp = jax.random.split(key)
    x = jax.random.normal(kx, (batch, input_size), jnp.float32)
    params = init_params(kp, input_size, hidden_size1, hidden_size2, output_size)

    out = jax.block_until_ready(complex_nn_forward(x, params))
    ref = reference_forward(x, params)
    assert out.shape == (batch, output_size)
    assert jnp.allclose(out, ref, atol=1e-5, rtol=1e-5)

    # Exercise the multi-step + ragged-last-block path (B not a multiple of tm).
    big_b = 1000
    xb = jax.random.normal(jax.random.PRNGKey(1), (big_b, input_size), jnp.float32)
    out_b = jax.block_until_ready(complex_nn_forward(xb, params))
    assert out_b.shape == (big_b, output_size)
    assert jnp.allclose(out_b, reference_forward(xb, params), atol=1e-5, rtol=1e-5)

    print("KERNEL_OK")
</pallas_src>

<mosaic_0001>
module attributes {stable_mosaic.version = 11 : i64} {
  func.func @mlp_kernel(%arg0: i32, %arg1: memref<8x16xf32, #tpu.memory_space<vmem>>, %arg2: memref<16x128xf32, #tpu.memory_space<vmem>>, %arg3: memref<1x128xf32, #tpu.memory_space<vmem>>, %arg4: memref<128x128xf32, #tpu.memory_space<vmem>>, %arg5: memref<1x128xf32, #tpu.memory_space<vmem>>, %arg6: memref<128x1xf32, #tpu.memory_space<vmem>>, %arg7: memref<1x1xf32, #tpu.memory_space<vmem>>, %arg8: memref<8x1xf32, #tpu.memory_space<vmem>>) attributes {dimension_semantics = [#tpu.dimension_semantics<parallel>], iteration_bounds = array<i64: 1>, scalar_prefetch = 0 : i64, scratch_operands = 0 : i64, tpu.core_type = #tpu.core_type<tc>, window_params = [{transform_indices = @transform_0, window_bounds = array<i64: 8, 16>}, {pipeline_mode = #tpu.pipeline_mode<synchronous>, transform_indices = @transform_1, window_bounds = array<i64: 16, 128>}, {pipeline_mode = #tpu.pipeline_mode<synchronous>, transform_indices = @transform_2, window_bounds = array<i64: 1, 128>}, {pipeline_mode = #tpu.pipeline_mode<synchronous>, transform_indices = @transform_3, window_bounds = array<i64: 128, 128>}, {pipeline_mode = #tpu.pipeline_mode<synchronous>, transform_indices = @transform_4, window_bounds = array<i64: 1, 128>}, {pipeline_mode = #tpu.pipeline_mode<synchronous>, transform_indices = @transform_5, window_bounds = array<i64: 128, 1>}, {pipeline_mode = #tpu.pipeline_mode<synchronous>, transform_indices = @transform_6, window_bounds = array<i64: 1, 1>}, {transform_indices = @transform_7, window_bounds = array<i64: 8, 1>}]} {
    %c0 = arith.constant 0 : index
    %c0_0 = arith.constant 0 : index
    %0 = vector.load %arg1[%c0, %c0_0] : memref<8x16xf32, #tpu.memory_space<vmem>>, vector<8x16xf32>
    %c0_1 = arith.constant 0 : index
    %c0_2 = arith.constant 0 : index
    %1 = vector.load %arg2[%c0_1, %c0_2] : memref<16x128xf32, #tpu.memory_space<vmem>>, vector<16x128xf32>
    %cst = arith.constant dense<0.000000e+00> : vector<8x128xf32>
    %2 = tpu.matmul %0, %1, %cst {dimension_numbers = #tpu.dot_dimension_numbers<[1], [0], [0], [1], [0, 0, 1, 1], [], []>} : vector<8x16xf32>, vector<16x128xf32>, vector<8x128xf32> -> vector<8x128xf32>
    %c0_3 = arith.constant 0 : index
    %c0_4 = arith.constant 0 : index
    %3 = vector.load %arg3[%c0_3, %c0_4] : memref<1x128xf32, #tpu.memory_space<vmem>>, vector<1x128xf32>
    %4 = vector.broadcast %3 : vector<1x128xf32> to vector<8x128xf32>
    %5 = arith.addf %2, %4 : vector<8x128xf32>
    %cst_5 = arith.constant 0.000000e+00 : f32
    %6 = vector.broadcast %cst_5 : f32 to vector<8x128xf32>
    %7 = arith.maximumf %5, %6 : vector<8x128xf32>
    %c0_6 = arith.constant 0 : index
    %c0_7 = arith.constant 0 : index
    %8 = vector.load %arg4[%c0_6, %c0_7] : memref<128x128xf32, #tpu.memory_space<vmem>>, vector<128x128xf32>
    %cst_8 = arith.constant dense<0.000000e+00> : vector<8x128xf32>
    %9 = tpu.matmul %7, %8, %cst_8 {dimension_numbers = #tpu.dot_dimension_numbers<[1], [0], [0], [1], [0, 0, 1, 1], [], []>} : vector<8x128xf32>, vector<128x128xf32>, vector<8x128xf32> -> vector<8x128xf32>
    %c0_9 = arith.constant 0 : index
    %c0_10 = arith.constant 0 : index
    %10 = vector.load %arg5[%c0_9, %c0_10] : memref<1x128xf32, #tpu.memory_space<vmem>>, vector<1x128xf32>
    %11 = vector.broadcast %10 : vector<1x128xf32> to vector<8x128xf32>
    %12 = arith.addf %9, %11 : vector<8x128xf32>
    %cst_11 = arith.constant 0.000000e+00 : f32
    %13 = vector.broadcast %cst_11 : f32 to vector<8x128xf32>
    %14 = arith.maximumf %12, %13 : vector<8x128xf32>
    %c0_12 = arith.constant 0 : index
    %c0_13 = arith.constant 0 : index
    %15 = vector.load %arg6[%c0_12, %c0_13] : memref<128x1xf32, #tpu.memory_space<vmem>>, vector<128x1xf32>
    %cst_14 = arith.constant dense<0.000000e+00> : vector<8x1xf32>
    %16 = tpu.matmul %14, %15, %cst_14 {dimension_numbers = #tpu.dot_dimension_numbers<[1], [0], [0], [1], [0, 0, 1, 1], [], []>} : vector<8x128xf32>, vector<128x1xf32>, vector<8x1xf32> -> vector<8x1xf32>
    %c0_15 = arith.constant 0 : index
    %c0_16 = arith.constant 0 : index
    %17 = vector.load %arg7[%c0_15, %c0_16] : memref<1x1xf32, #tpu.memory_space<vmem>>, vector<1x1xf32>
    %18 = vector.broadcast %17 : vector<1x1xf32> to vector<8x1xf32>
    %19 = arith.addf %16, %18 : vector<8x1xf32>
    %c0_17 = arith.constant 0 : index
    %c0_18 = arith.constant 0 : index
    %20 = vector.load %arg8[%c0_17, %c0_18] : memref<8x1xf32, #tpu.memory_space<vmem>>, vector<8x1xf32>
    tpu.vector_store %arg8[%c0_17, %c0_18], %19 {strides = array<i32>} : memref<8x1xf32, #tpu.memory_space<vmem>>, vector<8x1xf32>,
    return
  }
  func.func @transform_0(%arg0: i32) -> (i32, i32) {
    %c0_i32 = arith.constant 0 : i32
    %c0_i32_0 = arith.constant 0 : i32
    return %arg0, %c0_i32 : i32, i32
  }
  func.func @transform_1(%arg0: i32) -> (i32, i32) {
    %c0_i32 = arith.constant 0 : i32
    %c0_i32_0 = arith.constant 0 : i32
    %c0_i32_1 = arith.constant 0 : i32
    return %c0_i32, %c0_i32_0 : i32, i32
  }
  func.func @transform_2(%arg0: i32) -> (i32, i32) {
    %c0_i32 = arith.constant 0 : i32
    %c0_i32_0 = arith.constant 0 : i32
    %c0_i32_1 = arith.constant 0 : i32
    return %c0_i32, %c0_i32_0 : i32, i32
  }
  func.func @transform_3(%arg0: i32) -> (i32, i32) {
    %c0_i32 = arith.constant 0 : i32
    %c0_i32_0 = arith.constant 0 : i32
    %c0_i32_1 = arith.constant 0 : i32
    return %c0_i32, %c0_i32_0 : i32, i32
  }
  func.func @transform_4(%arg0: i32) -> (i32, i32) {
    %c0_i32 = arith.constant 0 : i32
    %c0_i32_0 = arith.constant 0 : i32
    %c0_i32_1 = arith.constant 0 : i32
    return %c0_i32, %c0_i32_0 : i32, i32
  }
  func.func @transform_5(%arg0: i32) -> (i32, i32) {
    %c0_i32 = arith.constant 0 : i32
    %c0_i32_0 = arith.constant 0 : i32
    %c0_i32_1 = arith.constant 0 : i32
    return %c0_i32, %c0_i32_0 : i32, i32
  }
  func.func @transform_6(%arg0: i32) -> (i32, i32) {
    %c0_i32 = arith.constant 0 : i32
    %c0_i32_0 = arith.constant 0 : i32
    %c0_i32_1 = arith.constant 0 : i32
    return %c0_i32, %c0_i32_0 : i32, i32
  }
  func.func @transform_7(%arg0: i32) -> (i32, i32) {
    %c0_i32 = arith.constant 0 : i32
    %c0_i32_0 = arith.constant 0 : i32
    return %arg0, %c0_i32 : i32, i32
  }
}

</mosaic_0001>

<llo_original>
// kernel: tpu_custom_call.1
$region0: #{tpu_custom_call.1}
  #allocation0 [shape = 'u32[]', space=smem, size = 0x4, offset = 0x4, fixed_abs, tag = 'smem constant byte address 0x4 - core index']
  #allocation1 [shape = 'u32[144,128]{1,0:T(1,128)}', space=vmem, size = 0x12000, scoped, tag = 'internal scratch']
  #allocation2 [shape = 'f32[1,1]{1,0:T(1,128)S(1)}', space=vmem, size = 0x200, scoped, tag = 'scoped memory for tpu_custom_call.1']
  %s0 = inlined_call_operand.vmem [shape: f32[8,16], index: 0, kind: input, shape index: {}]
  %s1 = inlined_call_operand.hbm [shape: f32[16,128], index: 1, kind: input, shape index: {}]
  %s2 = inlined_call_operand.hbm [shape: f32[1,128], index: 2, kind: input, shape index: {}]
  %s3 = inlined_call_operand.vmem [shape: f32[128,128], index: 3, kind: input, shape index: {}]
  %s4 = inlined_call_operand.vmem [shape: f32[1,128], index: 4, kind: input, shape index: {}]
  %s5 = inlined_call_operand.vmem [shape: f32[128,1], index: 5, kind: input, shape index: {}]
  %s6 = inlined_call_operand.<no memory space> [shape: f32[1,1], index: 6, kind: input, shape index: {}]
  %s7 = inlined_call_operand.vmem [shape: f32[8,1], index: 7, kind: output, shape index: {}]
  %s8 = sld [smem:[#allocation0]]
  $region46: #{tpu_custom_call.1} parent=0
    _
  %s10 = ssub.s32 1, %s8
  %s11 = scalar_select 0, %s10, %s8
  %v12 = vstv %s6
  %13 = vst [vmem:[#allocation2] sm:$0x1] %v12
  $region1: #{tpu_custom_call.1} parent=0
    #allocation3 [shape = 'u8[8192]{0}', space=vmem, size = 0x2000, scoped, tag = 'input window, operand 1, single buffered']
    #allocation4 [shape = 's32[1]{0}', space=sflag, size = 0x4, scoped, tag = 'scoped memory for tpu_custom_call.1']
    #allocation5 [shape = 'u8[512]{0}', space=vmem, size = 0x400, scoped, tag = 'input window, operand 2, single buffered']
    #allocation6 [shape = 's32[1]{0}', space=sflag, size = 0x4, scoped, tag = 'scoped memory for tpu_custom_call.1']
    %14 = vsyncpa [#allocation4], 0
    %15 = vsyncpa [#allocation6], 0
    // Predicated region
    $region2: #{tpu_custom_call.1} parent=1 // pred_check
      _
    $region3: #{tpu_custom_call.1} parent=1 // pred_check_branch
      %17 = sbr.rel (0) target = $region5
    $region4: #{tpu_custom_call.1} parent=1 // pred_region
      _
    $region5: #{tpu_custom_call.1} parent=1 // pred_fallthru
      _
    // Predicated region
    $region6: #{tpu_custom_call.1} parent=1 // pred_check
      _
    $region7: #{tpu_custom_call.1} parent=1 // pred_check_branch
      %19 = sbr.rel (0) target = $region9
    $region8: #{tpu_custom_call.1} parent=1 // pred_region
      %s21 = ssub.s32 256, 256
      %22 = vsyncadd [#allocation4], %s21
      %s23 = sshll.u32 [#allocation3], 4
      %s24 = int_to_ptr.vmem [resolvable:$true] %s23
      %29 = dma.hbm_to_vmem [thread:$0]  %s1, 256, %s24, [#allocation4], 128, 128, 8
    $region9: #{tpu_custom_call.1} parent=1 // pred_fallthru
      _
    // Predicated region
    $region10: #{tpu_custom_call.1} parent=1 // pred_check
      _
    $region11: #{tpu_custom_call.1} parent=1 // pred_check_branch
      %31 = sbr.rel (0) target = $region13
    $region12: #{tpu_custom_call.1} parent=1 // pred_region
      %s33 = ssub.s32 16, 16
      %34 = vsyncadd [#allocation6], %s33
      %s36 = sshll.u32 [#allocation5], 4
      %s37 = int_to_ptr.vmem [resolvable:$true] %s36
      %39 = dma.hbm_to_vmem [thread:$0]  %s2, 16, %s37, [#allocation6]
    $region13: #{tpu_custom_call.1} parent=1 // pred_fallthru
      _
    // Predicated region
    $region14: #{tpu_custom_call.1} parent=1 // pred_check
      _
    $region15: #{tpu_custom_call.1} parent=1 // pred_check_branch
      %41 = sbr.rel (0) target = $region17
    $region16: #{tpu_custom_call.1} parent=1 // pred_region
      _
    $region17: #{tpu_custom_call.1} parent=1 // pred_fallthru
      _
    // Predicated region
    $region18: #{tpu_custom_call.1} parent=1 // pred_check
      _
    $region19: #{tpu_custom_call.1} parent=1 // pred_check_branch
      %43 = sbr.rel (0) target = $region21
    $region20: #{tpu_custom_call.1} parent=1 // pred_region
      _
    $region21: #{tpu_custom_call.1} parent=1 // pred_fallthru
      _
    // Predicated region
    $region22: #{tpu_custom_call.1} parent=1 // pred_check
      _
    $region23: #{tpu_custom_call.1} parent=1 // pred_check_branch
      %45 = sbr.rel (0) target = $region25
    $region24: #{tpu_custom_call.1} parent=1 // pred_region
      _
    $region25: #{tpu_custom_call.1} parent=1 // pred_fallthru
      _
    // Predicated region
    $region26: #{tpu_custom_call.1} parent=1 // pred_check
      _
    $region27: #{tpu_custom_call.1} parent=1 // pred_check_branch
      %47 = sbr.rel (0) target = $region29
    $region28: #{tpu_custom_call.1} parent=1 // pred_region
      _
    $region29: #{tpu_custom_call.1} parent=1 // pred_fallthru
      _
    // Predicated region
    $region30: #{tpu_custom_call.1} parent=1 // pred_check
      _
    $region31: #{tpu_custom_call.1} parent=1 // pred_check_branch
      %49 = sbr.rel (0) target = $region33
    $region32: #{tpu_custom_call.1} parent=1 // pred_region
      %50 = dma.done [#allocation4], 256
    $region33: #{tpu_custom_call.1} parent=1 // pred_fallthru
      _
    // Predicated region
    $region34: #{tpu_custom_call.1} parent=1 // pred_check
      _
    $region35: #{tpu_custom_call.1} parent=1 // pred_check_branch
      %52 = sbr.rel (0) target = $region37
    $region36: #{tpu_custom_call.1} parent=1 // pred_region
      %53 = dma.done [#allocation6], 16
    $region37: #{tpu_custom_call.1} parent=1 // pred_fallthru
      _
    %v54 = vld [vmem:[%s0] sm:$0xff]
    %v55 = vld [vmem:[#allocation3] sm:$0xff]
    %v56 = vld [vmem:[#allocation3 + $0x8] sm:$0xff]
    %v57 = vld [vmem:[#allocation5] sm:$0x1]
    %v59 = vlaneseq
    %v60 = vshrl.u32 %v59, 7
    %v61 = vsub.s32 0, %v60
    %v62 = vrot.slane %v57, %v61
    %vm64 = vcmask 130048
    %v66 = vsel %vm64, %v54, 0
    %68 = vmatprep.subr.mxu0 0.0
    %69 = vmatpush1.msra.mxu0 0.0
    %70 = vmatprep.subr.mxu0 0.0
    %71 = vmatpush1.msra.mxu0 0.0
    %72 = vmatprep.subr.mxu0 0.0
    %73 = vmatpush1.msra.mxu0 0.0
    %74 = vmatprep.subr.mxu0 0.0
    %75 = vmatpush1.msra.mxu0 0.0
    %76 = vmatprep.subr.mxu0 0.0
    %77 = vmatpush1.msra.mxu0 0.0
    %78 = vmatprep.subr.mxu0 0.0
    %79 = vmatpush1.msra.mxu0 0.0
    %80 = vmatprep.subr.mxu0 0.0
    %81 = vmatpush1.msra.mxu0 0.0
    %82 = vmatprep.subr.mxu0 0.0
    %83 = vmatpush1.msra.mxu0 0.0
    %84 = vmatprep.subr.mxu0 0.0
    %85 = vmatpush1.msra.mxu0 0.0
    %86 = vmatprep.subr.mxu0 0.0
    %87 = vmatpush1.msra.mxu0 0.0
    %88 = vmatprep.subr.mxu0 0.0
    %89 = vmatpush1.msra.mxu0 0.0
    %90 = vmatprep.subr.mxu0 0.0
    %91 = vmatpush1.msra.mxu0 0.0
    %92 = vmatprep.subr.mxu0 0.0
    %93 = vmatpush1.msra.mxu0 0.0
    %94 = vmatprep.subr.mxu0 0.0
    %95 = vmatpush1.msra.mxu0 0.0
    %96 = vmatprep.subr.mxu0 0.0
    %97 = vmatpush1.msra.mxu0 %v56
    %98 = vmatprep.subr.mxu0 0.0
    %99 = vmatpush1.msra.mxu0 %v55
    %100 = vmatprep.subr.mxu0 0.0
    %101 = vmatpush2.msra.mxu0 0.0
    %102 = vmatprep.subr.mxu0 0.0
    %103 = vmatpush2.msra.mxu0 0.0
    %104 = vmatprep.subr.mxu0 0.0
    %105 = vmatpush2.msra.mxu0 0.0
    %106 = vmatprep.subr.mxu0 0.0
    %107 = vmatpush2.msra.mxu0 0.0
    %108 = vmatprep.subr.mxu0 0.0
    %109 = vmatpush2.msra.mxu0 0.0
    %110 = vmatprep.subr.mxu0 0.0
    %111 = vmatpush2.msra.mxu0 0.0
    %112 = vmatprep.subr.mxu0 0.0
    %113 = vmatpush2.msra.mxu0 0.0
    %114 = vmatprep.subr.mxu0 0.0
    %115 = vmatpush2.msra.mxu0 0.0
    %116 = vmatprep.subr.mxu0 0.0
    %117 = vmatpush2.msra.mxu0 0.0
    %118 = vmatprep.subr.mxu0 0.0
    %119 = vmatpush2.msra.mxu0 0.0
    %120 = vmatprep.subr.mxu0 0.0
    %121 = vmatpush2.msra.mxu0 0.0
    %122 = vmatprep.subr.mxu0 0.0
    %123 = vmatpush2.msra.mxu0 0.0
    %124 = vmatprep.subr.mxu0 0.0
    %125 = vmatpush2.msra.mxu0 0.0
    %126 = vmatprep.subr.mxu0 0.0
    %127 = vmatpush2.msra.mxu0 0.0
    %128 = vmatprep.subr.mxu0 0.0
    %129 = vmatpush2.msra.mxu0 0.0
    %130 = vmatprep.subr.mxu0 0.0
    %131 = vmatpush2.msra.mxu0 0.0
    %132 = vmatprep.mubr.f32.mxu0 0.0
    %133 = vmatmul.mubr.f32.gmra.mxu0 %v66
    %v134 = vpop.f32.mrf.mxu0
    %v135 = vadd.f32 %v62, %v134
    %v136 = vpop.f32.mrf.mxu0
    %137 = vdwg.mxu0
    %v138 = vmax.f32 %v135, 0.0
    %v139 = vld [vmem:[%s3] sm:$0xff]
    %v140 = vld [vmem:[%s3 + $0x8] sm:$0xff]
    %v141 = vld [vmem:[%s3 + $0x10] sm:$0xff]
    %v142 = vld [vmem:[%s3 + $0x18] sm:$0xff]
    %v143 = vld [vmem:[%s3 + $0x20] sm:$0xff]
    %v144 = vld [vmem:[%s3 + $0x28] sm:$0xff]
    %v145 = vld [vmem:[%s3 + $0x30] sm:$0xff]
    %v146 = vld [vmem:[%s3 + $0x38] sm:$0xff]
    %v147 = vld [vmem:[%s3 + $0x40] sm:$0xff]
    %v148 = vld [vmem:[%s3 + $0x48] sm:$0xff]
    %v149 = vld [vmem:[%s3 + $0x50] sm:$0xff]
    %v150 = vld [vmem:[%s3 + $0x58] sm:$0xff]
    %v151 = vld [vmem:[%s3 + $0x60] sm:$0xff]
    %v152 = vld [vmem:[%s3 + $0x68] sm:$0xff]
    %v153 = vld [vmem:[%s3 + $0x70] sm:$0xff]
    %v154 = vld [vmem:[%s3 + $0x78] sm:$0xff]
    %v155 = vld [vmem:[%s4] sm:$0x1]
    %v157 = vlaneseq
    %v158 = vshrl.u32 %v157, 7
    %v159 = vsub.s32 0, %v158
    %v160 = vrot.slane %v155, %v159
    %162 = vmatprep.subr.mxu0 0.0
    %163 = vmatpush1.msra.mxu0 %v154
    %164 = vmatprep.subr.mxu0 0.0
    %165 = vmatpush1.msra.mxu0 %v153
    %166 = vmatprep.subr.mxu0 0.0
    %167 = vmatpush1.msra.mxu0 %v152
    %168 = vmatprep.subr.mxu0 0.0
    %169 = vmatpush1.msra.mxu0 %v151
    %170 = vmatprep.subr.mxu0 0.0
    %171 = vmatpush1.msra.mxu0 %v150
    %172 = vmatprep.subr.mxu0 0.0
    %173 = vmatpush1.msra.mxu0 %v149
    %174 = vmatprep.subr.mxu0 0.0
    %175 = vmatpush1.msra.mxu0 %v148
    %176 = vmatprep.subr.mxu0 0.0
    %177 = vmatpush1.msra.mxu0 %v147
    %178 = vmatprep.subr.mxu0 0.0
    %179 = vmatpush1.msra.mxu0 %v146
    %180 = vmatprep.subr.mxu0 0.0
    %181 = vmatpush1.msra.mxu0 %v145
    %182 = vmatprep.subr.mxu0 0.0
    %183 = vmatpush1.msra.mxu0 %v144
    %184 = vmatprep.subr.mxu0 0.0
    %185 = vmatpush1.msra.mxu0 %v143
    %186 = vmatprep.subr.mxu0 0.0
    %187 = vmatpush1.msra.mxu0 %v142
    %188 = vmatprep.subr.mxu0 0.0
    %189 = vmatpush1.msra.mxu0 %v141
    %190 = vmatprep.subr.mxu0 0.0
    %191 = vmatpush1.msra.mxu0 %v140
    %192 = vmatprep.subr.mxu0 0.0
    %193 = vmatpush1.msra.mxu0 %v139
    %194 = vmatprep.subr.mxu0 0.0
    %195 = vmatpush2.msra.mxu0 0.0
    %196 = vmatprep.subr.mxu0 0.0
    %197 = vmatpush2.msra.mxu0 0.0
    %198 = vmatprep.subr.mxu0 0.0
    %199 = vmatpush2.msra.mxu0 0.0
    %200 = vmatprep.subr.mxu0 0.0
    %201 = vmatpush2.msra.mxu0 0.0
    %202 = vmatprep.subr.mxu0 0.0
    %203 = vmatpush2.msra.mxu0 0.0
    %204 = vmatprep.subr.mxu0 0.0
    %205 = vmatpush2.msra.mxu0 0.0
    %206 = vmatprep.subr.mxu0 0.0
    %207 = vmatpush2.msra.mxu0 0.0
    %208 = vmatprep.subr.mxu0 0.0
    %209 = vmatpush2.msra.mxu0 0.0
    %210 = vmatprep.subr.mxu0 0.0
    %211 = vmatpush2.msra.mxu0 0.0
    %212 = vmatprep.subr.mxu0 0.0
    %213 = vmatpush2.msra.mxu0 0.0
    %214 = vmatprep.subr.mxu0 0.0
    %215 = vmatpush2.msra.mxu0 0.0
    %216 = vmatprep.subr.mxu0 0.0
    %217 = vmatpush2.msra.mxu0 0.0
    %218 = vmatprep.subr.mxu0 0.0
    %219 = vmatpush2.msra.mxu0 0.0
    %220 = vmatprep.subr.mxu0 0.0
    %221 = vmatpush2.msra.mxu0 0.0
    %222 = vmatprep.subr.mxu0 0.0
    %223 = vmatpush2.msra.mxu0 0.0
    %224 = vmatprep.subr.mxu0 0.0
    %225 = vmatpush2.msra.mxu0 0.0
    %226 = vmatprep.mubr.f32.mxu0 0.0
    %227 = vmatmul.mubr.f32.gmra.mxu0 %v138
    %v228 = vpop.f32.mrf.mxu0
    %v229 = vadd.f32 %v160, %v228
    %v230 = vpop.f32.mrf.mxu0
    %231 = vdwg.mxu0
    %v232 = vmax.f32 %v229, 0.0
    %v233 = vld [vmem:[%s5] sm:$0xff]
    %v234 = vld [vmem:[%s5 + $0x8] sm:$0xff]
    %v235 = vld [vmem:[%s5 + $0x10] sm:$0xff]
    %v236 = vld [vmem:[%s5 + $0x18] sm:$0xff]
    %v237 = vld [vmem:[%s5 + $0x20] sm:$0xff]
    %v238 = vld [vmem:[%s5 + $0x28] sm:$0xff]
    %v239 = vld [vmem:[%s5 + $0x30] sm:$0xff]
    %v240 = vld [vmem:[%s5 + $0x38] sm:$0xff]
    %v241 = vld [vmem:[%s5 + $0x40] sm:$0xff]
    %v242 = vld [vmem:[%s5 + $0x48] sm:$0xff]
    %v243 = vld [vmem:[%s5 + $0x50] sm:$0xff]
    %v244 = vld [vmem:[%s5 + $0x58] sm:$0xff]
    %v245 = vld [vmem:[%s5 + $0x60] sm:$0xff]
    %v246 = vld [vmem:[%s5 + $0x68] sm:$0xff]
    %v247 = vld [vmem:[%s5 + $0x70] sm:$0xff]
    %v248 = vld [vmem:[%s5 + $0x78] sm:$0xff]
    %v249 = vld [vmem:[#allocation2] sm:$0x1]
    %v251 = vlaneseq
    %v252 = vshrl.u32 %v251, 7
    %v253 = vsub.s32 0, %v252
    %v254 = vrot.slane %v249, %v253
    %256 = vmatprep.subr.mxu0 0.0
    %257 = vmatpush1.msra.mxu0 %v248
    %258 = vmatprep.subr.mxu0 0.0
    %259 = vmatpush1.msra.mxu0 %v247
    %260 = vmatprep.subr.mxu0 0.0
    %261 = vmatpush1.msra.mxu0 %v246
    %262 = vmatprep.subr.mxu0 0.0
    %263 = vmatpush1.msra.mxu0 %v245
    %264 = vmatprep.subr.mxu0 0.0
    %265 = vmatpush1.msra.mxu0 %v244
    %266 = vmatprep.subr.mxu0 0.0
    %267 = vmatpush1.msra.mxu0 %v243
    %268 = vmatprep.subr.mxu0 0.0
    %269 = vmatpush1.msra.mxu0 %v242
    %270 = vmatprep.subr.mxu0 0.0
    %271 = vmatpush1.msra.mxu0 %v241
    %272 = vmatprep.subr.mxu0 0.0
    %273 = vmatpush1.msra.mxu0 %v240
    %274 = vmatprep.subr.mxu0 0.0
    %275 = vmatpush1.msra.mxu0 %v239
    %276 = vmatprep.subr.mxu0 0.0
    %277 = vmatpush1.msra.mxu0 %v238
    %278 = vmatprep.subr.mxu0 0.0
    %279 = vmatpush1.msra.mxu0 %v237
    %280 = vmatprep.subr.mxu0 0.0
    %281 = vmatpush1.msra.mxu0 %v236
    %282 = vmatprep.subr.mxu0 0.0
    %283 = vmatpush1.msra.mxu0 %v235
    %284 = vmatprep.subr.mxu0 0.0
    %285 = vmatpush1.msra.mxu0 %v234
    %286 = vmatprep.subr.mxu0 0.0
    %287 = vmatpush1.msra.mxu0 %v233
    %288 = vmatprep.subr.mxu0 0.0
    %289 = vmatpush2.msra.mxu0 0.0
    %290 = vmatprep.subr.mxu0 0.0
    %291 = vmatpush2.msra.mxu0 0.0
    %292 = vmatprep.subr.mxu0 0.0
    %293 = vmatpush2.msra.mxu0 0.0
    %294 = vmatprep.subr.mxu0 0.0
    %295 = vmatpush2.msra.mxu0 0.0
    %296 = vmatprep.subr.mxu0 0.0
    %297 = vmatpush2.msra.mxu0 0.0
    %298 = vmatprep.subr.mxu0 0.0
    %299 = vmatpush2.msra.mxu0 0.0
    %300 = vmatprep.subr.mxu0 0.0
    %301 = vmatpush2.msra.mxu0 0.0
    %302 = vmatprep.subr.mxu0 0.0
    %303 = vmatpush2.msra.mxu0 0.0
    %304 = vmatprep.subr.mxu0 0.0
    %305 = vmatpush2.msra.mxu0 0.0
    %306 = vmatprep.subr.mxu0 0.0
    %307 = vmatpush2.msra.mxu0 0.0
    %308 = vmatprep.subr.mxu0 0.0
    %309 = vmatpush2.msra.mxu0 0.0
    %310 = vmatprep.subr.mxu0 0.0
    %311 = vmatpush2.msra.mxu0 0.0
    %312 = vmatprep.subr.mxu0 0.0
    %313 = vmatpush2.msra.mxu0 0.0
    %314 = vmatprep.subr.mxu0 0.0
    %315 = vmatpush2.msra.mxu0 0.0
    %316 = vmatprep.subr.mxu0 0.0
    %317 = vmatpush2.msra.mxu0 0.0
    %318 = vmatprep.subr.mxu0 0.0
    %319 = vmatpush2.msra.mxu0 0.0
    %320 = vmatprep.mubr.f32.mxu0 0.0
    %321 = vmatmul.mubr.f32.gmra.mxu0 %v232
    %v322 = vpop.f32.mrf.mxu0
    %v323 = vadd.f32 %v254, %v322
    %v324 = vpop.f32.mrf.mxu0
    %325 = vdwg.mxu0
    %vm326 = vcmask 7168
    %327 = vst.msk [vmem:[%s7] sm:$0xff] %vm326, %v323
    // Predicated region
    $region38: #{tpu_custom_call.1} parent=1 // pred_check
      _
    $region39: #{tpu_custom_call.1} parent=1 // pred_check_branch
      %329 = sbr.rel (0) target = $region41
    $region40: #{tpu_custom_call.1} parent=1 // pred_region
      _
    $region41: #{tpu_custom_call.1} parent=1 // pred_fallthru
      _
    // Predicated region
    $region42: #{tpu_custom_call.1} parent=1 // pred_check
      _
    $region43: #{tpu_custom_call.1} parent=1 // pred_check_branch
      %331 = sbr.rel (0) target = $region45
    $region44: #{tpu_custom_call.1} parent=1 // pred_region
      _
    $region45: #{tpu_custom_call.1} parent=1 // pred_fallthru
      _
    %332 = vsyncpa [#allocation4], 1
    %333 = vsyncpa [#allocation6], 1

</llo_original>
